<compile_context>
chip_gen: v5e
topology: v5e:2x2
jax: 0.10.0
libtpu: 0.0.40
codegen_flags: <defaults>
</compile_context>

<pallas_src>
import math

import jax
import jax.numpy as jnp
from jax.experimental import pallas as pl
from jax.experimental.pallas import tpu as pltpu

# Hyperparameters from MLP_X.__init__ defaults.
DIM = 2
DATA_SIZE = 128
COND_IN_SIZE = 128

D_IN = DIM * DATA_SIZE          # 256
D_HID = 2 * DIM * DATA_SIZE     # 512
D_OUT = COND_IN_SIZE            # 128


def mlp_x_kernel(x_ref, w1_ref, b1_ref, w2_ref, b2_ref, out_ref):
    x = x_ref[...].astype(jnp.float32)                       # (1, D_IN)

    # fc1: (1, D_IN) @ (D_IN, D_HID) + b1
    h = jnp.dot(x, w1_ref[...], preferred_element_type=jnp.float32) + b1_ref[...]

    # CELU(alpha=1): max(0, h) + min(0, exp(h) - 1).
    # Computed as maximum(h, 0) + expm1(minimum(h, 0)) so exp never sees
    # large positive arguments (exp(0) - 1 == 0 on the positive branch).
    h = jnp.maximum(h, 0.0) + (jnp.exp(jnp.minimum(h, 0.0)) - 1.0)

    # fc2: (1, D_HID) @ (D_HID, D_OUT) + b2
    y = jnp.dot(h, w2_ref[...], preferred_element_type=jnp.float32) + b2_ref[...]
    out_ref[...] = y.astype(out_ref.dtype)


def mlp_x_forward(x, params):
    """x: any shape with DIM*DATA_SIZE total elements (PyTorch does x.view(-1))."""
    w1, b1, w2, b2 = params
    x_flat = x.reshape(1, -1).astype(jnp.float32)            # (1, 256)
    assert x_flat.shape == (1, D_IN), x_flat.shape

    vmem = pl.BlockSpec(memory_space=pltpu.MemorySpace.VMEM)
    out = pl.pallas_call(
        mlp_x_kernel,
        out_shape=jax.ShapeDtypeStruct((1, D_OUT), jnp.float32),
        in_specs=[vmem] * 5,
        out_specs=vmem,
    )(x_flat, w1, b1, w2, b2)
    return out[0]                                            # (128,), matches PyTorch


def init_params(key):
    """nn.Linear default init: U(-1/sqrt(fan_in), 1/sqrt(fan_in)) for W and b.

    Weights stored pre-transposed as (in, out) so the kernel does y = x @ W + b.
    Biases stored as (1, out) rows (lane-dense, broadcast over the single row).
    """
    k1, k2, k3, k4 = jax.random.split(key, 4)

    def u(k, shape, fan_in):
        lim = 1.0 / math.sqrt(fan_in)
        return jax.random.uniform(k, shape, jnp.float32, -lim, lim)

    w1 = u(k1, (D_IN, D_HID), D_IN)
    b1 = u(k2, (1, D_HID), D_IN)
    w2 = u(k3, (D_HID, D_OUT), D_HID)
    b2 = u(k4, (1, D_OUT), D_HID)
    return (w1, b1, w2, b2)


def mlp_x_reference(x, params):
    """Pure-JAX reference of the PyTorch forward (for correctness check)."""
    w1, b1, w2, b2 = params
    xf = x.reshape(-1).astype(jnp.float32)
    h = xf @ w1 + b1[0]
    h = jnp.maximum(h, 0.0) + (jnp.exp(jnp.minimum(h, 0.0)) - 1.0)   # CELU(alpha=1)
    return h @ w2 + b2[0]


if __name__ == "__main__":
    key = jax.random.PRNGKey(0)
    kx, kp = jax.random.split(key)

    # Input consistent with the module: (dim, data_size) = (2, 128); the
    # forward flattens it to a length-256 vector via view(-1).
    x = jax.random.normal(kx, (DIM, DATA_SIZE), jnp.float32)
    params = init_params(kp)

    y = mlp_x_forward(x, params)
    y = jax.block_until_ready(y)

    assert y.shape == (D_OUT,), y.shape
    assert bool(jnp.all(jnp.isfinite(y)))

    y_ref = mlp_x_reference(x, params)
    assert bool(jnp.allclose(y, y_ref, atol=1e-5, rtol=1e-5))

    print("KERNEL_OK")
</pallas_src>

<mosaic_0001>
module attributes {stable_mosaic.version = 11 : i64} {
  func.func @mlp_x_kernel(%arg0: memref<1x256xf32, #tpu.memory_space<vmem>>, %arg1: memref<256x512xf32, #tpu.memory_space<vmem>>, %arg2: memref<1x512xf32, #tpu.memory_space<vmem>>, %arg3: memref<512x128xf32, #tpu.memory_space<vmem>>, %arg4: memref<1x128xf32, #tpu.memory_space<vmem>>, %arg5: memref<1x128xf32, #tpu.memory_space<vmem>>) attributes {dimension_semantics = [], scalar_prefetch = 0 : i64, scratch_operands = 0 : i64, tpu.core_type = #tpu.core_type<tc>} {
    %c0 = arith.constant 0 : index
    %c0_0 = arith.constant 0 : index
    %0 = vector.load %arg0[%c0, %c0_0] : memref<1x256xf32, #tpu.memory_space<vmem>>, vector<1x256xf32>
    %c0_1 = arith.constant 0 : index
    %c0_2 = arith.constant 0 : index
    %1 = vector.load %arg1[%c0_1, %c0_2] : memref<256x512xf32, #tpu.memory_space<vmem>>, vector<256x512xf32>
    %cst = arith.constant dense<0.000000e+00> : vector<1x512xf32>
    %2 = tpu.matmul %0, %1, %cst {dimension_numbers = #tpu.dot_dimension_numbers<[1], [0], [0], [1], [0, 0, 1, 1], [], []>} : vector<1x256xf32>, vector<256x512xf32>, vector<1x512xf32> -> vector<1x512xf32>
    %c0_3 = arith.constant 0 : index
    %c0_4 = arith.constant 0 : index
    %3 = vector.load %arg2[%c0_3, %c0_4] : memref<1x512xf32, #tpu.memory_space<vmem>>, vector<1x512xf32>
    %4 = arith.addf %2, %3 : vector<1x512xf32>
    %cst_5 = arith.constant 0.000000e+00 : f32
    %5 = vector.broadcast %cst_5 : f32 to vector<1x512xf32>
    %6 = arith.maximumf %4, %5 : vector<1x512xf32>
    %cst_6 = arith.constant 0.000000e+00 : f32
    %7 = vector.broadcast %cst_6 : f32 to vector<1x512xf32>
    %8 = arith.minimumf %4, %7 : vector<1x512xf32>
    %9 = math.exp %8 : vector<1x512xf32>
    %cst_7 = arith.constant 1.000000e+00 : f32
    %10 = vector.broadcast %cst_7 : f32 to vector<1x512xf32>
    %11 = arith.subf %9, %10 : vector<1x512xf32>
    %12 = arith.addf %6, %11 : vector<1x512xf32>
    %c0_8 = arith.constant 0 : index
    %c0_9 = arith.constant 0 : index
    %13 = vector.load %arg3[%c0_8, %c0_9] : memref<512x128xf32, #tpu.memory_space<vmem>>, vector<512x128xf32>
    %cst_10 = arith.constant dense<0.000000e+00> : vector<1x128xf32>
    %14 = tpu.matmul %12, %13, %cst_10 {dimension_numbers = #tpu.dot_dimension_numbers<[1], [0], [0], [1], [0, 0, 1, 1], [], []>} : vector<1x512xf32>, vector<512x128xf32>, vector<1x128xf32> -> vector<1x128xf32>
    %c0_11 = arith.constant 0 : index
    %c0_12 = arith.constant 0 : index
    %15 = vector.load %arg4[%c0_11, %c0_12] : memref<1x128xf32, #tpu.memory_space<vmem>>, vector<1x128xf32>
    %16 = arith.addf %14, %15 : vector<1x128xf32>
    %c0_13 = arith.constant 0 : index
    %c0_14 = arith.constant 0 : index
    %17 = vector.load %arg5[%c0_13, %c0_14] : memref<1x128xf32, #tpu.memory_space<vmem>>, vector<1x128xf32>
    tpu.vector_store %arg5[%c0_13, %c0_14], %16 {strides = array<i32>} : memref<1x128xf32, #tpu.memory_space<vmem>>, vector<1x128xf32>,
    return
  }
}

</mosaic_0001>

<llo_original>
// kernel: tpu_custom_call.1
$region0: #{tpu_custom_call.1}
  #allocation0 [shape = 'u32[]', space=smem, size = 0x4, offset = 0x4, fixed_abs, tag = 'smem constant byte address 0x4 - core index']
  #allocation1 [shape = 'u32[72,128]{1,0:T(1,128)}', space=vmem, size = 0x9000, scoped, tag = 'internal scratch']
  %s0 = inlined_call_operand.hbm [shape: f32[1,256], index: 0, kind: input, shape index: {}]
  %s1 = inlined_call_operand.hbm [shape: f32[256,512], index: 1, kind: input, shape index: {}]
  %s2 = inlined_call_operand.hbm [shape: f32[1,512], index: 2, kind: input, shape index: {}]
  %s3 = inlined_call_operand.hbm [shape: f32[512,128], index: 3, kind: input, shape index: {}]
  %s4 = inlined_call_operand.vmem [shape: f32[1,128], index: 4, kind: input, shape index: {}]
  %s5 = inlined_call_operand.hbm [shape: f32[1,128], index: 5, kind: output, shape index: {}]
  %s6 = sld [smem:[#allocation0]]
  $region46: #{tpu_custom_call.1} parent=0
    _
  %s8 = ssub.s32 1, %s6
  %s9 = scalar_select 0, %s8, %s6
  $region1: #{tpu_custom_call.1} parent=0
    #allocation2 [shape = 'u8[1024]{0}', space=vmem, size = 0x400, scoped, tag = 'input window, operand 0, single buffered']
    #allocation3 [shape = 's32[1]{0}', space=sflag, size = 0x4, scoped, tag = 'scoped memory for tpu_custom_call.1']
    #allocation4 [shape = 's32[1]{0}', space=sflag, size = 0x4, scoped, tag = 'scoped memory for tpu_custom_call.1']
    #allocation5 [shape = 'u8[524288]{0}', space=vmem, size = 0x80000, scoped, tag = 'input window, operand 1, single buffered']
    #allocation6 [shape = 's32[1]{0}', space=sflag, size = 0x4, scoped, tag = 'scoped memory for tpu_custom_call.1']
    #allocation7 [shape = 'u8[2048]{0}', space=vmem, size = 0x800, scoped, tag = 'input window, operand 2, single buffered']
    #allocation8 [shape = 'u8[262144]{0}', space=vmem, size = 0x40000, scoped, tag = 'input window, operand 3, single buffered']
    #allocation9 [shape = 's32[1]{0}', space=sflag, size = 0x4, scoped, tag = 'scoped memory for tpu_custom_call.1']
    #allocation10 [shape = 'u8[512]{0}', space=vmem, size = 0x400, scoped, tag = 'output window, operand 0, single buffered']
    %10 = vsyncpa [#allocation3], 0
    %11 = vsyncpa [#allocation6], 0
    %12 = vsyncpa [#allocation9], 0
    %13 = vsyncpa [#allocation4], 0
    // Predicated region
    $region2: #{tpu_custom_call.1} parent=1 // pred_check
      _
    $region3: #{tpu_custom_call.1} parent=1 // pred_check_branch
      %15 = sbr.rel (0) target = $region5
    $region4: #{tpu_custom_call.1} parent=1 // pred_region
      %17 = vsyncadd [#allocation3], 0
      %s19 = sshll.u32 %s0, 4
      %s20 = int_to_ptr.hbm [resolvable:$true] %s19
      %s21 = sshll.u32 [#allocation2], 4
      %s22 = int_to_ptr.vmem [resolvable:$true] %s21
      %24 = dma.hbm_to_vmem [thread:$0]  %s20, 32, %s22, [#allocation3]
    $region5: #{tpu_custom_call.1} parent=1 // pred_fallthru
      _
    // Predicated region
    $region6: #{tpu_custom_call.1} parent=1 // pred_check
      _
    $region7: #{tpu_custom_call.1} parent=1 // pred_check_branch
      %26 = sbr.rel (0) target = $region9
    $region8: #{tpu_custom_call.1} parent=1 // pred_region
      %28 = vsyncadd [#allocation6], 0
      %s29 = sshll.u32 %s1, 4
      %s30 = int_to_ptr.hbm [resolvable:$true] %s29
      %s31 = sshll.u32 [#allocation5], 4
      %s32 = int_to_ptr.vmem [resolvable:$true] %s31
      %37 = dma.hbm_to_vmem [thread:$0]  %s30, 16384, %s32, [#allocation6], 512, 512, 32
    $region9: #{tpu_custom_call.1} parent=1 // pred_fallthru
      _
    // Predicated region
    $region10: #{tpu_custom_call.1} parent=1 // pred_check
      _
    $region11: #{tpu_custom_call.1} parent=1 // pred_check_branch
      %39 = sbr.rel (0) target = $region13
    $region12: #{tpu_custom_call.1} parent=1 // pred_region
      %41 = vsyncadd [#allocation6], 0
      %s43 = sshll.u32 %s2, 4
      %s44 = int_to_ptr.hbm [resolvable:$true] %s43
      %s45 = sshll.u32 [#allocation7], 4
      %s46 = int_to_ptr.vmem [resolvable:$true] %s45
      %48 = dma.hbm_to_vmem [thread:$0]  %s44, 64, %s46, [#allocation6]
    $region13: #{tpu_custom_call.1} parent=1 // pred_fallthru
      _
    // Predicated region
    $region14: #{tpu_custom_call.1} parent=1 // pred_check
      _
    $region15: #{tpu_custom_call.1} parent=1 // pred_check_branch
      %50 = sbr.rel (0) target = $region17
    $region16: #{tpu_custom_call.1} parent=1 // pred_region
      %52 = vsyncadd [#allocation9], 0
      %s53 = sshll.u32 %s3, 4
      %s54 = int_to_ptr.hbm [resolvable:$true] %s53
      %s55 = sshll.u32 [#allocation8], 4
      %s56 = int_to_ptr.vmem [resolvable:$true] %s55
      %61 = dma.hbm_to_vmem [thread:$0]  %s54, 8192, %s56, [#allocation9], 128, 128, 8
    $region17: #{tpu_custom_call.1} parent=1 // pred_fallthru
      _
    // Predicated region
    $region18: #{tpu_custom_call.1} parent=1 // pred_check
      _
    $region19: #{tpu_custom_call.1} parent=1 // pred_check_branch
      %63 = sbr.rel (0) target = $region21
    $region20: #{tpu_custom_call.1} parent=1 // pred_region
      _
    $region21: #{tpu_custom_call.1} parent=1 // pred_fallthru
      _
    // Predicated region
    $region22: #{tpu_custom_call.1} parent=1 // pred_check
      _
    $region23: #{tpu_custom_call.1} parent=1 // pred_check_branch
      %65 = sbr.rel (0) target = $region25
    $region24: #{tpu_custom_call.1} parent=1 // pred_region
      %67 = dma.done [#allocation3], 32
    $region25: #{tpu_custom_call.1} parent=1 // pred_fallthru
      _
    // Predicated region
    $region26: #{tpu_custom_call.1} parent=1 // pred_check
      _
    $region27: #{tpu_custom_call.1} parent=1 // pred_check_branch
      %69 = sbr.rel (0) target = $region29
    $region28: #{tpu_custom_call.1} parent=1 // pred_region
      %71 = dma.done [#allocation6], 16384
    $region29: #{tpu_custom_call.1} parent=1 // pred_fallthru
      _
    // Predicated region
    $region30: #{tpu_custom_call.1} parent=1 // pred_check
      _
    $region31: #{tpu_custom_call.1} parent=1 // pred_check_branch
      %73 = sbr.rel (0) target = $region33
    $region32: #{tpu_custom_call.1} parent=1 // pred_region
      %75 = dma.done [#allocation6], 64
    $region33: #{tpu_custom_call.1} parent=1 // pred_fallthru
      _
    // Predicated region
    $region34: #{tpu_custom_call.1} parent=1 // pred_check
      _
    $region35: #{tpu_custom_call.1} parent=1 // pred_check_branch
      %77 = sbr.rel (0) target = $region37
    $region36: #{tpu_custom_call.1} parent=1 // pred_region
      %79 = dma.done [#allocation9], 8192
    $region37: #{tpu_custom_call.1} parent=1 // pred_fallthru
      _
    %v80 = vld [vmem:[#allocation2] sm:$0x3]
    %v81 = vld [vmem:[#allocation5] sm:$0xff]
    %v82 = vld [vmem:[#allocation5 + $0x8] sm:$0xff]
    %v83 = vld [vmem:[#allocation5 + $0x10] sm:$0xff]
    %v84 = vld [vmem:[#allocation5 + $0x18] sm:$0xff]
    %v85 = vld [vmem:[#allocation5 + $0x20] sm:$0xff]
    %v86 = vld [vmem:[#allocation5 + $0x28] sm:$0xff]
    %v87 = vld [vmem:[#allocation5 + $0x30] sm:$0xff]
    %v88 = vld [vmem:[#allocation5 + $0x38] sm:$0xff]
    %v89 = vld [vmem:[#allocation5 + $0x40] sm:$0xff]
    %v90 = vld [vmem:[#allocation5 + $0x48] sm:$0xff]
    %v91 = vld [vmem:[#allocation5 + $0x50] sm:$0xff]
    %v92 = vld [vmem:[#allocation5 + $0x58] sm:$0xff]
    %v93 = vld [vmem:[#allocation5 + $0x60] sm:$0xff]
    %v94 = vld [vmem:[#allocation5 + $0x68] sm:$0xff]
    %v95 = vld [vmem:[#allocation5 + $0x70] sm:$0xff]
    %v96 = vld [vmem:[#allocation5 + $0x78] sm:$0xff]
    %v97 = vld [vmem:[#allocation5 + $0x80] sm:$0xff]
    %v98 = vld [vmem:[#allocation5 + $0x88] sm:$0xff]
    %v99 = vld [vmem:[#allocation5 + $0x90] sm:$0xff]
    %v100 = vld [vmem:[#allocation5 + $0x98] sm:$0xff]
    %v101 = vld [vmem:[#allocation5 + $0xa0] sm:$0xff]
    %v102 = vld [vmem:[#allocation5 + $0xa8] sm:$0xff]
    %v103 = vld [vmem:[#allocation5 + $0xb0] sm:$0xff]
    %v104 = vld [vmem:[#allocation5 + $0xb8] sm:$0xff]
    %v105 = vld [vmem:[#allocation5 + $0xc0] sm:$0xff]
    %v106 = vld [vmem:[#allocation5 + $0xc8] sm:$0xff]
    %v107 = vld [vmem:[#allocation5 + $0xd0] sm:$0xff]
    %v108 = vld [vmem:[#allocation5 + $0xd8] sm:$0xff]
    %v109 = vld [vmem:[#allocation5 + $0xe0] sm:$0xff]
    %v110 = vld [vmem:[#allocation5 + $0xe8] sm:$0xff]
    %v111 = vld [vmem:[#allocation5 + $0xf0] sm:$0xff]
    %v112 = vld [vmem:[#allocation5 + $0xf8] sm:$0xff]
    %v113 = vld [vmem:[#allocation5 + $0x100] sm:$0xff]
    %v114 = vld [vmem:[#allocation5 + $0x108] sm:$0xff]
    %v115 = vld [vmem:[#allocation5 + $0x110] sm:$0xff]
    %v116 = vld [vmem:[#allocation5 + $0x118] sm:$0xff]
    %v117 = vld [vmem:[#allocation5 + $0x120] sm:$0xff]
    %v118 = vld [vmem:[#allocation5 + $0x128] sm:$0xff]
    %v119 = vld [vmem:[#allocation5 + $0x130] sm:$0xff]
    %v120 = vld [vmem:[#allocation5 + $0x138] sm:$0xff]
    %v121 = vld [vmem:[#allocation5 + $0x140] sm:$0xff]
    %v122 = vld [vmem:[#allocation5 + $0x148] sm:$0xff]
    %v123 = vld [vmem:[#allocation5 + $0x150] sm:$0xff]
    %v124 = vld [vmem:[#allocation5 + $0x158] sm:$0xff]
    %v125 = vld [vmem:[#allocation5 + $0x160] sm:$0xff]
    %v126 = vld [vmem:[#allocation5 + $0x168] sm:$0xff]
    %v127 = vld [vmem:[#allocation5 + $0x170] sm:$0xff]
    %v128 = vld [vmem:[#allocation5 + $0x178] sm:$0xff]
    %v129 = vld [vmem:[#allocation5 + $0x180] sm:$0xff]
    %v130 = vld [vmem:[#allocation5 + $0x188] sm:$0xff]
    %v131 = vld [vmem:[#allocation5 + $0x190] sm:$0xff]
    %v132 = vld [vmem:[#allocation5 + $0x198] sm:$0xff]
    %v133 = vld [vmem:[#allocation5 + $0x1a0] sm:$0xff]
    %v134 = vld [vmem:[#allocation5 + $0x1a8] sm:$0xff]
    %v135 = vld [vmem:[#allocation5 + $0x1b0] sm:$0xff]
    %v136 = vld [vmem:[#allocation5 + $0x1b8] sm:$0xff]
    %v137 = vld [vmem:[#allocation5 + $0x1c0] sm:$0xff]
    %v138 = vld [vmem:[#allocation5 + $0x1c8] sm:$0xff]
    %v139 = vld [vmem:[#allocation5 + $0x1d0] sm:$0xff]
    %v140 = vld [vmem:[#allocation5 + $0x1d8] sm:$0xff]
    %v141 = vld [vmem:[#allocation5 + $0x1e0] sm:$0xff]
    %v142 = vld [vmem:[#allocation5 + $0x1e8] sm:$0xff]
    %v143 = vld [vmem:[#allocation5 + $0x1f0] sm:$0xff]
    %v144 = vld [vmem:[#allocation5 + $0x1f8] sm:$0xff]
    %v145 = vld [vmem:[#allocation5 + $0x200] sm:$0xff]
    %v146 = vld [vmem:[#allocation5 + $0x208] sm:$0xff]
    %v147 = vld [vmem:[#allocation5 + $0x210] sm:$0xff]
    %v148 = vld [vmem:[#allocation5 + $0x218] sm:$0xff]
    %v149 = vld [vmem:[#allocation5 + $0x220] sm:$0xff]
    %v150 = vld [vmem:[#allocation5 + $0x228] sm:$0xff]
    %v151 = vld [vmem:[#allocation5 + $0x230] sm:$0xff]
    %v152 = vld [vmem:[#allocation5 + $0x238] sm:$0xff]
    %v153 = vld [vmem:[#allocation5 + $0x240] sm:$0xff]
    %v154 = vld [vmem:[#allocation5 + $0x248] sm:$0xff]
    %v155 = vld [vmem:[#allocation5 + $0x250] sm:$0xff]
    %v156 = vld [vmem:[#allocation5 + $0x258] sm:$0xff]
    %v157 = vld [vmem:[#allocation5 + $0x260] sm:$0xff]
    %v158 = vld [vmem:[#allocation5 + $0x268] sm:$0xff]
    %v159 = vld [vmem:[#allocation5 + $0x270] sm:$0xff]
    %v160 = vld [vmem:[#allocation5 + $0x278] sm:$0xff]
    %v161 = vld [vmem:[#allocation5 + $0x280] sm:$0xff]
    %v162 = vld [vmem:[#allocation5 + $0x288] sm:$0xff]
    %v163 = vld [vmem:[#allocation5 + $0x290] sm:$0xff]
    %v164 = vld [vmem:[#allocation5 + $0x298] sm:$0xff]
    %v165 = vld [vmem:[#allocation5 + $0x2a0] sm:$0xff]
    %v166 = vld [vmem:[#allocation5 + $0x2a8] sm:$0xff]
    %v167 = vld [vmem:[#allocation5 + $0x2b0] sm:$0xff]
    %v168 = vld [vmem:[#allocation5 + $0x2b8] sm:$0xff]
    %v169 = vld [vmem:[#allocation5 + $0x2c0] sm:$0xff]
    %v170 = vld [vmem:[#allocation5 + $0x2c8] sm:$0xff]
    %v171 = vld [vmem:[#allocation5 + $0x2d0] sm:$0xff]
    %v172 = vld [vmem:[#allocation5 + $0x2d8] sm:$0xff]
    %v173 = vld [vmem:[#allocation5 + $0x2e0] sm:$0xff]
    %v174 = vld [vmem:[#allocation5 + $0x2e8] sm:$0xff]
    %v175 = vld [vmem:[#allocation5 + $0x2f0] sm:$0xff]
    %v176 = vld [vmem:[#allocation5 + $0x2f8] sm:$0xff]
    %v177 = vld [vmem:[#allocation5 + $0x300] sm:$0xff]
    %v178 = vld [vmem:[#allocation5 + $0x308] sm:$0xff]
    %v179 = vld [vmem:[#allocation5 + $0x310] sm:$0xff]
    %v180 = vld [vmem:[#allocation5 + $0x318] sm:$0xff]
    %v181 = vld [vmem:[#allocation5 + $0x320] sm:$0xff]
    %v182 = vld [vmem:[#allocation5 + $0x328] sm:$0xff]
    %v183 = vld [vmem:[#allocation5 + $0x330] sm:$0xff]
    %v184 = vld [vmem:[#allocation5 + $0x338] sm:$0xff]
    %v185 = vld [vmem:[#allocation5 + $0x340] sm:$0xff]
    %v186 = vld [vmem:[#allocation5 + $0x348] sm:$0xff]
    %v187 = vld [vmem:[#allocation5 + $0x350] sm:$0xff]
    %v188 = vld [vmem:[#allocation5 + $0x358] sm:$0xff]
    %v189 = vld [vmem:[#allocation5 + $0x360] sm:$0xff]
    %v190 = vld [vmem:[#allocation5 + $0x368] sm:$0xff]
    %v191 = vld [vmem:[#allocation5 + $0x370] sm:$0xff]
    %v192 = vld [vmem:[#allocation5 + $0x378] sm:$0xff]
    %v193 = vld [vmem:[#allocation5 + $0x380] sm:$0xff]
    %v194 = vld [vmem:[#allocation5 + $0x388] sm:$0xff]
    %v195 = vld [vmem:[#allocation5 + $0x390] sm:$0xff]
    %v196 = vld [vmem:[#allocation5 + $0x398] sm:$0xff]
    %v197 = vld [vmem:[#allocation5 + $0x3a0] sm:$0xff]
    %v198 = vld [vmem:[#allocation5 + $0x3a8] sm:$0xff]
    %v199 = vld [vmem:[#allocation5 + $0x3b0] sm:$0xff]
    %v200 = vld [vmem:[#allocation5 + $0x3b8] sm:$0xff]
    %v201 = vld [vmem:[#allocation5 + $0x3c0] sm:$0xff]
    %v202 = vld [vmem:[#allocation5 + $0x3c8] sm:$0xff]
    %v203 = vld [vmem:[#allocation5 + $0x3d0] sm:$0xff]
    %v204 = vld [vmem:[#allocation5 + $0x3d8] sm:$0xff]
    %v205 = vld [vmem:[#allocation5 + $0x3e0] sm:$0xff]
    %v206 = vld [vmem:[#allocation5 + $0x3e8] sm:$0xff]
    %v207 = vld [vmem:[#allocation5 + $0x3f0] sm:$0xff]
    %v208 = vld [vmem:[#allocation5 + $0x3f8] sm:$0xff]
    %v209 = vld [vmem:[#allocation7] sm:$0xf]
    %v211 = vperm.slane %v80, 0
    %v212 = vperm.slane %v80, 1
    %v216 = vperm.slane %v209, 0
    %v217 = vperm.slane %v209, 1
    %v218 = vperm.slane %v209, 2
    %v219 = vperm.slane %v209, 3
    %224 = vmatpush.msra.mxu0 %v141
    %225 = vmatpush.msra.mxu0 %v137
    %226 = vmatpush.msra.mxu0 %v133
    %227 = vmatpush.msra.mxu0 %v129
    %228 = vmatpush.msra.mxu0 %v125
    %229 = vmatpush.msra.mxu0 %v121
    %230 = vmatpush.msra.mxu0 %v117
    %231 = vmatpush.msra.mxu0 %v113
    %232 = vmatpush.msra.mxu0 %v109
    %233 = vmatpush.msra.mxu0 %v105
    %234 = vmatpush.msra.mxu0 %v101
    %235 = vmatpush.msra.mxu0 %v97
    %236 = vmatpush.msra.mxu0 %v93
    %237 = vmatpush.msra.mxu0 %v89
    %238 = vmatpush.msra.mxu0 %v85
    %239 = vmatpush.msra.mxu0 %v81
    %240 = vmatmul.f32.gmra.mxu0 %v211
    %v241 = vpop.f32.mrf.mxu0
    %v242 = vadd.f32 %v216, %v241
    %243 = vdwg.mxu0
    %244 = vmatpush.msra.mxu0 %v205
    %245 = vmatpush.msra.mxu0 %v201
    %246 = vmatpush.msra.mxu0 %v197
    %247 = vmatpush.msra.mxu0 %v193
    %248 = vmatpush.msra.mxu0 %v189
    %249 = vmatpush.msra.mxu0 %v185
    %250 = vmatpush.msra.mxu0 %v181
    %251 = vmatpush.msra.mxu0 %v177
    %252 = vmatpush.msra.mxu0 %v173
    %253 = vmatpush.msra.mxu0 %v169
    %254 = vmatpush.msra.mxu0 %v165
    %255 = vmatpush.msra.mxu0 %v161
    %256 = vmatpush.msra.mxu0 %v157
    %257 = vmatpush.msra.mxu0 %v153
    %258 = vmatpush.msra.mxu0 %v149
    %259 = vmatpush.msra.mxu0 %v145
    %260 = vmatmul.f32.gmra.mxu0 %v212
    %v261 = vpop.f32.mrf.mxu0
    %v262 = vadd.f32 %v242, %v261
    %263 = vdwg.mxu0
    %264 = vmatpush.msra.mxu0 %v142
    %265 = vmatpush.msra.mxu0 %v138
    %266 = vmatpush.msra.mxu0 %v134
    %267 = vmatpush.msra.mxu0 %v130
    %268 = vmatpush.msra.mxu0 %v126
    %269 = vmatpush.msra.mxu0 %v122
    %270 = vmatpush.msra.mxu0 %v118
    %271 = vmatpush.msra.mxu0 %v114
    %272 = vmatpush.msra.mxu0 %v110
    %273 = vmatpush.msra.mxu0 %v106
    %274 = vmatpush.msra.mxu0 %v102
    %275 = vmatpush.msra.mxu0 %v98
    %276 = vmatpush.msra.mxu0 %v94
    %277 = vmatpush.msra.mxu0 %v90
    %278 = vmatpush.msra.mxu0 %v86
    %279 = vmatpush.msra.mxu0 %v82
    %280 = vmatmul.f32.gmra.mxu0 %v211
    %v281 = vpop.f32.mrf.mxu0
    %v282 = vadd.f32 %v217, %v281
    %283 = vdwg.mxu0
    %284 = vmatpush.msra.mxu0 %v206
    %285 = vmatpush.msra.mxu0 %v202
    %286 = vmatpush.msra.mxu0 %v198
    %287 = vmatpush.msra.mxu0 %v194
    %288 = vmatpush.msra.mxu0 %v190
    %289 = vmatpush.msra.mxu0 %v186
    %290 = vmatpush.msra.mxu0 %v182
    %291 = vmatpush.msra.mxu0 %v178
    %292 = vmatpush.msra.mxu0 %v174
    %293 = vmatpush.msra.mxu0 %v170
    %294 = vmatpush.msra.mxu0 %v166
    %295 = vmatpush.msra.mxu0 %v162
    %296 = vmatpush.msra.mxu0 %v158
    %297 = vmatpush.msra.mxu0 %v154
    %298 = vmatpush.msra.mxu0 %v150
    %299 = vmatpush.msra.mxu0 %v146
    %300 = vmatmul.f32.gmra.mxu0 %v212
    %v301 = vpop.f32.mrf.mxu0
    %v302 = vadd.f32 %v282, %v301
    %303 = vdwg.mxu0
    %304 = vmatpush.msra.mxu0 %v143
    %305 = vmatpush.msra.mxu0 %v139
    %306 = vmatpush.msra.mxu0 %v135
    %307 = vmatpush.msra.mxu0 %v131
    %308 = vmatpush.msra.mxu0 %v127
    %309 = vmatpush.msra.mxu0 %v123
    %310 = vmatpush.msra.mxu0 %v119
    %311 = vmatpush.msra.mxu0 %v115
    %312 = vmatpush.msra.mxu0 %v111
    %313 = vmatpush.msra.mxu0 %v107
    %314 = vmatpush.msra.mxu0 %v103
    %315 = vmatpush.msra.mxu0 %v99
    %316 = vmatpush.msra.mxu0 %v95
    %317 = vmatpush.msra.mxu0 %v91
    %318 = vmatpush.msra.mxu0 %v87
    %319 = vmatpush.msra.mxu0 %v83
    %320 = vmatmul.f32.gmra.mxu0 %v211
    %v321 = vpop.f32.mrf.mxu0
    %v322 = vadd.f32 %v218, %v321
    %323 = vdwg.mxu0
    %324 = vmatpush.msra.mxu0 %v207
    %325 = vmatpush.msra.mxu0 %v203
    %326 = vmatpush.msra.mxu0 %v199
    %327 = vmatpush.msra.mxu0 %v195
    %328 = vmatpush.msra.mxu0 %v191
    %329 = vmatpush.msra.mxu0 %v187
    %330 = vmatpush.msra.mxu0 %v183
    %331 = vmatpush.msra.mxu0 %v179
    %332 = vmatpush.msra.mxu0 %v175
    %333 = vmatpush.msra.mxu0 %v171
    %334 = vmatpush.msra.mxu0 %v167
    %335 = vmatpush.msra.mxu0 %v163
    %336 = vmatpush.msra.mxu0 %v159
    %337 = vmatpush.msra.mxu0 %v155
    %338 = vmatpush.msra.mxu0 %v151
    %339 = vmatpush.msra.mxu0 %v147
    %340 = vmatmul.f32.gmra.mxu0 %v212
    %v341 = vpop.f32.mrf.mxu0
    %v342 = vadd.f32 %v322, %v341
    %343 = vdwg.mxu0
    %344 = vmatpush.msra.mxu0 %v144
    %345 = vmatpush.msra.mxu0 %v140
    %346 = vmatpush.msra.mxu0 %v136
    %347 = vmatpush.msra.mxu0 %v132
    %348 = vmatpush.msra.mxu0 %v128
    %349 = vmatpush.msra.mxu0 %v124
    %350 = vmatpush.msra.mxu0 %v120
    %351 = vmatpush.msra.mxu0 %v116
    %352 = vmatpush.msra.mxu0 %v112
    %353 = vmatpush.msra.mxu0 %v108
    %354 = vmatpush.msra.mxu0 %v104
    %355 = vmatpush.msra.mxu0 %v100
    %356 = vmatpush.msra.mxu0 %v96
    %357 = vmatpush.msra.mxu0 %v92
    %358 = vmatpush.msra.mxu0 %v88
    %359 = vmatpush.msra.mxu0 %v84
    %360 = vmatmul.f32.gmra.mxu0 %v211
    %v361 = vpop.f32.mrf.mxu0
    %v362 = vadd.f32 %v219, %v361
    %363 = vdwg.mxu0
    %364 = vmatpush.msra.mxu0 %v208
    %365 = vmatpush.msra.mxu0 %v204
    %366 = vmatpush.msra.mxu0 %v200
    %367 = vmatpush.msra.mxu0 %v196
    %368 = vmatpush.msra.mxu0 %v192
    %369 = vmatpush.msra.mxu0 %v188
    %370 = vmatpush.msra.mxu0 %v184
    %371 = vmatpush.msra.mxu0 %v180
    %372 = vmatpush.msra.mxu0 %v176
    %373 = vmatpush.msra.mxu0 %v172
    %374 = vmatpush.msra.mxu0 %v168
    %375 = vmatpush.msra.mxu0 %v164
    %376 = vmatpush.msra.mxu0 %v160
    %377 = vmatpush.msra.mxu0 %v156
    %378 = vmatpush.msra.mxu0 %v152
    %379 = vmatpush.msra.mxu0 %v148
    %380 = vmatmul.f32.gmra.mxu0 %v212
    %v381 = vpop.f32.mrf.mxu0
    %v382 = vadd.f32 %v362, %v381
    %383 = vdwg.mxu0
    %v384 = vmax.f32 %v262, 0.0
    %v385 = vmax.f32 %v302, 0.0
    %v386 = vmax.f32 %v342, 0.0
    %v387 = vmax.f32 %v382, 0.0
    %v388 = vmin.f32 %v262, 0.0
    %v389 = vmin.f32 %v302, 0.0
    %v390 = vmin.f32 %v342, 0.0
    %v391 = vmin.f32 %v382, 0.0
    %v392 = vmul.f32 %v388, 1.442695
    %v393 = vpow.pop %v392
    %v394 = vmul.f32 %v389, 1.442695
    %v395 = vpow.pop %v394
    %v396 = vmul.f32 %v390, 1.442695
    %v397 = vpow.pop %v396
    %v398 = vmul.f32 %v391, 1.442695
    %v399 = vpow.pop %v398
    %v400 = vsub.f32 %v393, 1.0
    %v401 = vsub.f32 %v395, 1.0
    %v402 = vsub.f32 %v397, 1.0
    %v403 = vsub.f32 %v399, 1.0
    %v404 = vadd.f32 %v384, %v400
    %v405 = vadd.f32 %v385, %v401
    %v406 = vadd.f32 %v386, %v402
    %v407 = vadd.f32 %v387, %v403
    %v408 = vld [vmem:[#allocation8] sm:$0xff]
    %v409 = vld [vmem:[#allocation8 + $0x8] sm:$0xff]
    %v410 = vld [vmem:[#allocation8 + $0x10] sm:$0xff]
    %v411 = vld [vmem:[#allocation8 + $0x18] sm:$0xff]
    %v412 = vld [vmem:[#allocation8 + $0x20] sm:$0xff]
    %v413 = vld [vmem:[#allocation8 + $0x28] sm:$0xff]
    %v414 = vld [vmem:[#allocation8 + $0x30] sm:$0xff]
    %v415 = vld [vmem:[#allocation8 + $0x38] sm:$0xff]
    %v416 = vld [vmem:[#allocation8 + $0x40] sm:$0xff]
    %v417 = vld [vmem:[#allocation8 + $0x48] sm:$0xff]
    %v418 = vld [vmem:[#allocation8 + $0x50] sm:$0xff]
    %v419 = vld [vmem:[#allocation8 + $0x58] sm:$0xff]
    %v420 = vld [vmem:[#allocation8 + $0x60] sm:$0xff]
    %v421 = vld [vmem:[#allocation8 + $0x68] sm:$0xff]
    %v422 = vld [vmem:[#allocation8 + $0x70] sm:$0xff]
    %v423 = vld [vmem:[#allocation8 + $0x78] sm:$0xff]
    %v424 = vld [vmem:[#allocation8 + $0x80] sm:$0xff]
    %v425 = vld [vmem:[#allocation8 + $0x88] sm:$0xff]
    %v426 = vld [vmem:[#allocation8 + $0x90] sm:$0xff]
    %v427 = vld [vmem:[#allocation8 + $0x98] sm:$0xff]
    %v428 = vld [vmem:[#allocation8 + $0xa0] sm:$0xff]
    %v429 = vld [vmem:[#allocation8 + $0xa8] sm:$0xff]
    %v430 = vld [vmem:[#allocation8 + $0xb0] sm:$0xff]
    %v431 = vld [vmem:[#allocation8 + $0xb8] sm:$0xff]
    %v432 = vld [vmem:[#allocation8 + $0xc0] sm:$0xff]
    %v433 = vld [vmem:[#allocation8 + $0xc8] sm:$0xff]
    %v434 = vld [vmem:[#allocation8 + $0xd0] sm:$0xff]
    %v435 = vld [vmem:[#allocation8 + $0xd8] sm:$0xff]
    %v436 = vld [vmem:[#allocation8 + $0xe0] sm:$0xff]
    %v437 = vld [vmem:[#allocation8 + $0xe8] sm:$0xff]
    %v438 = vld [vmem:[#allocation8 + $0xf0] sm:$0xff]
    %v439 = vld [vmem:[#allocation8 + $0xf8] sm:$0xff]
    %v440 = vld [vmem:[#allocation8 + $0x100] sm:$0xff]
    %v441 = vld [vmem:[#allocation8 + $0x108] sm:$0xff]
    %v442 = vld [vmem:[#allocation8 + $0x110] sm:$0xff]
    %v443 = vld [vmem:[#allocation8 + $0x118] sm:$0xff]
    %v444 = vld [vmem:[#allocation8 + $0x120] sm:$0xff]
    %v445 = vld [vmem:[#allocation8 + $0x128] sm:$0xff]
    %v446 = vld [vmem:[#allocation8 + $0x130] sm:$0xff]
    %v447 = vld [vmem:[#allocation8 + $0x138] sm:$0xff]
    %v448 = vld [vmem:[#allocation8 + $0x140] sm:$0xff]
    %v449 = vld [vmem:[#allocation8 + $0x148] sm:$0xff]
    %v450 = vld [vmem:[#allocation8 + $0x150] sm:$0xff]
    %v451 = vld [vmem:[#allocation8 + $0x158] sm:$0xff]
    %v452 = vld [vmem:[#allocation8 + $0x160] sm:$0xff]
    %v453 = vld [vmem:[#allocation8 + $0x168] sm:$0xff]
    %v454 = vld [vmem:[#allocation8 + $0x170] sm:$0xff]
    %v455 = vld [vmem:[#allocation8 + $0x178] sm:$0xff]
    %v456 = vld [vmem:[#allocation8 + $0x180] sm:$0xff]
    %v457 = vld [vmem:[#allocation8 + $0x188] sm:$0xff]
    %v458 = vld [vmem:[#allocation8 + $0x190] sm:$0xff]
    %v459 = vld [vmem:[#allocation8 + $0x198] sm:$0xff]
    %v460 = vld [vmem:[#allocation8 + $0x1a0] sm:$0xff]
    %v461 = vld [vmem:[#allocation8 + $0x1a8] sm:$0xff]
    %v462 = vld [vmem:[#allocation8 + $0x1b0] sm:$0xff]
    %v463 = vld [vmem:[#allocation8 + $0x1b8] sm:$0xff]
    %v464 = vld [vmem:[#allocation8 + $0x1c0] sm:$0xff]
    %v465 = vld [vmem:[#allocation8 + $0x1c8] sm:$0xff]
    %v466 = vld [vmem:[#allocation8 + $0x1d0] sm:$0xff]
    %v467 = vld [vmem:[#allocation8 + $0x1d8] sm:$0xff]
    %v468 = vld [vmem:[#allocation8 + $0x1e0] sm:$0xff]
    %v469 = vld [vmem:[#allocation8 + $0x1e8] sm:$0xff]
    %v470 = vld [vmem:[#allocation8 + $0x1f0] sm:$0xff]
    %v471 = vld [vmem:[#allocation8 + $0x1f8] sm:$0xff]
    %v472 = vld [vmem:[%s4] sm:$0x1]
    %473 = vmatpush.msra.mxu0 %v423
    %474 = vmatpush.msra.mxu0 %v422
    %475 = vmatpush.msra.mxu0 %v421
    %476 = vmatpush.msra.mxu0 %v420
    %477 = vmatpush.msra.mxu0 %v419
    %478 = vmatpush.msra.mxu0 %v418
    %479 = vmatpush.msra.mxu0 %v417
    %480 = vmatpush.msra.mxu0 %v416
    %481 = vmatpush.msra.mxu0 %v415
    %482 = vmatpush.msra.mxu0 %v414
    %483 = vmatpush.msra.mxu0 %v413
    %484 = vmatpush.msra.mxu0 %v412
    %485 = vmatpush.msra.mxu0 %v411
    %486 = vmatpush.msra.mxu0 %v410
    %487 = vmatpush.msra.mxu0 %v409
    %488 = vmatpush.msra.mxu0 %v408
    %489 = vmatmul.f32.gmra.mxu0 %v404
    %v490 = vpop.f32.mrf.mxu0
    %v491 = vadd.f32 %v472, %v490
    %492 = vdwg.mxu0
    %493 = vmatpush.msra.mxu0 %v439
    %494 = vmatpush.msra.mxu0 %v438
    %495 = vmatpush.msra.mxu0 %v437
    %496 = vmatpush.msra.mxu0 %v436
    %497 = vmatpush.msra.mxu0 %v435
    %498 = vmatpush.msra.mxu0 %v434
    %499 = vmatpush.msra.mxu0 %v433
    %500 = vmatpush.msra.mxu0 %v432
    %501 = vmatpush.msra.mxu0 %v431
    %502 = vmatpush.msra.mxu0 %v430
    %503 = vmatpush.msra.mxu0 %v429
    %504 = vmatpush.msra.mxu0 %v428
    %505 = vmatpush.msra.mxu0 %v427
    %506 = vmatpush.msra.mxu0 %v426
    %507 = vmatpush.msra.mxu0 %v425
    %508 = vmatpush.msra.mxu0 %v424
    %509 = vmatmul.f32.gmra.mxu0 %v405
    %v510 = vpop.f32.mrf.mxu0
    %v511 = vadd.f32 %v491, %v510
    %512 = vdwg.mxu0
    %513 = vmatpush.msra.mxu0 %v455
    %514 = vmatpush.msra.mxu0 %v454
    %515 = vmatpush.msra.mxu0 %v453
    %516 = vmatpush.msra.mxu0 %v452
    %517 = vmatpush.msra.mxu0 %v451
    %518 = vmatpush.msra.mxu0 %v450
    %519 = vmatpush.msra.mxu0 %v449
    %520 = vmatpush.msra.mxu0 %v448
    %521 = vmatpush.msra.mxu0 %v447
    %522 = vmatpush.msra.mxu0 %v446
    %523 = vmatpush.msra.mxu0 %v445
    %524 = vmatpush.msra.mxu0 %v444
    %525 = vmatpush.msra.mxu0 %v443
    %526 = vmatpush.msra.mxu0 %v442
    %527 = vmatpush.msra.mxu0 %v441
    %528 = vmatpush.msra.mxu0 %v440
    %529 = vmatmul.f32.gmra.mxu0 %v406
    %v530 = vpop.f32.mrf.mxu0
    %v531 = vadd.f32 %v511, %v530
    %532 = vdwg.mxu0
    %533 = vmatpush.msra.mxu0 %v471
    %534 = vmatpush.msra.mxu0 %v470
    %535 = vmatpush.msra.mxu0 %v469
    %536 = vmatpush.msra.mxu0 %v468
    %537 = vmatpush.msra.mxu0 %v467
    %538 = vmatpush.msra.mxu0 %v466
    %539 = vmatpush.msra.mxu0 %v465
    %540 = vmatpush.msra.mxu0 %v464
    %541 = vmatpush.msra.mxu0 %v463
    %542 = vmatpush.msra.mxu0 %v462
    %543 = vmatpush.msra.mxu0 %v461
    %544 = vmatpush.msra.mxu0 %v460
    %545 = vmatpush.msra.mxu0 %v459
    %546 = vmatpush.msra.mxu0 %v458
    %547 = vmatpush.msra.mxu0 %v457
    %548 = vmatpush.msra.mxu0 %v456
    %549 = vmatmul.f32.gmra.mxu0 %v407
    %v550 = vpop.f32.mrf.mxu0
    %v551 = vadd.f32 %v531, %v550
    %552 = vdwg.mxu0
    %553 = vst [vmem:[#allocation10] sm:$0x1] %v551
    // Predicated region
    $region38: #{tpu_custom_call.1} parent=1 // pred_check
      _
    $region39: #{tpu_custom_call.1} parent=1 // pred_check_branch
      %555 = sbr.rel (0) target = $region41
    $region40: #{tpu_custom_call.1} parent=1 // pred_region
      %557 = vsyncadd [#allocation4], 0
      %s559 = sshll.u32 [#allocation10], 4
      %s560 = int_to_ptr.vmem [resolvable:$true] %s559
      %s561 = sshll.u32 %s5, 4
      %s562 = int_to_ptr.hbm [resolvable:$true] %s561
      %564 = dma.vmem_to_hbm [thread:$0]  %s560, 16, %s562, [#allocation4]
    $region41: #{tpu_custom_call.1} parent=1 // pred_fallthru
      _
    // Predicated region
    $region42: #{tpu_custom_call.1} parent=1 // pred_check
      _
    $region43: #{tpu_custom_call.1} parent=1 // pred_check_branch
      %566 = sbr.rel (0) target = $region45
    $region44: #{tpu_custom_call.1} parent=1 // pred_region
      %568 = dma.done [#allocation4], 16
    $region45: #{tpu_custom_call.1} parent=1 // pred_fallthru
      _
    %569 = vsyncpa [#allocation3], 1
    %570 = vsyncpa [#allocation6], 1
    %571 = vsyncpa [#allocation9], 1
    %572 = vsyncpa [#allocation4], 1

</llo_original>
